<compile_context>
chip_gen: v7x
topology: tpu7x:2x2x1
jax: 0.10.0
libtpu: 0.0.40
codegen_flags: <defaults>
</compile_context>

<pallas_src>
import jax
import jax.numpy as jnp
from jax.experimental import pallas as pl
from jax.experimental.pallas import tpu as pltpu


def pad_vocab_size(vocab_size: int, pad_to: int = 64) -> int:
    return (vocab_size + pad_to - 1) // pad_to * pad_to


# ----------------------------- kernels ------------------------------------


def _make_kernel(has_bias: bool, multi_k: bool):
    """Build the logits kernel for a (T, V, K) grid.

    Block shapes seen by the kernel:
      x_ref  : (tile_t, tile_k)
      wt_ref : (tile_k, tile_v)   pre-transposed weight -> MXU-native RHS
      b_ref  : (1, tile_v)        (only when has_bias)
      o_ref  : (tile_t, tile_v)
      acc_ref: (tile_t, tile_v) f32 scratch (only when multi_k)
    """
    if multi_k:
        def kernel(*refs):
            if has_bias:
                x_ref, wt_ref, b_ref, o_ref, acc_ref = refs
            else:
                x_ref, wt_ref, o_ref, acc_ref = refs
                b_ref = None
            k = pl.program_id(2)

            @pl.when(k == 0)
            def _():
                acc_ref[...] = jnp.zeros_like(acc_ref)

            acc_ref[...] += jnp.dot(
                x_ref[...], wt_ref[...], preferred_element_type=jnp.float32
            )

            @pl.when(k == pl.num_programs(2) - 1)
            def _():
                acc = acc_ref[...]
                if has_bias:
                    acc = acc + b_ref[...].astype(jnp.float32)
                o_ref[...] = acc.astype(o_ref.dtype)
    else:
        def kernel(*refs):
            if has_bias:
                x_ref, wt_ref, b_ref, o_ref = refs
            else:
                x_ref, wt_ref, o_ref = refs
                b_ref = None
            acc = jnp.dot(
                x_ref[...], wt_ref[...], preferred_element_type=jnp.float32
            )
            if has_bias:
                acc = acc + b_ref[...].astype(jnp.float32)
            o_ref[...] = acc.astype(o_ref.dtype)

    return kernel


# ----------------------------- tiling --------------------------------------


_V_CANDS = (4096, 2048, 1024, 512, 256, 128)
_K_CANDS = (8192, 4096, 2048, 1024, 512, 256, 128)


def _tile_vmem_bytes(tile_t, tile_v, tile_k, x_bytes, w_bytes, o_bytes, b_bytes):
    # Double-buffered input/output tiles + (conservatively) one f32 accumulator.
    return (
        2 * tile_t * tile_k * x_bytes
        + 2 * tile_k * tile_v * w_bytes
        + 2 * tile_v * b_bytes
        + 2 * tile_t * tile_v * o_bytes
        + tile_t * tile_v * 4
    )


def _choose_tiles(T, H, Vp, x_bytes, w_bytes, o_bytes, b_bytes,
                  tile_t, tile_v, tile_k, vmem_budget_bytes):
    if tile_t is None:
        tile_t = T if T <= 256 else 256

    if tile_v is not None:
        v_cands = (tile_v,)
    else:
        v_cands = tuple(c for c in _V_CANDS if c <= Vp)
        if Vp <= _V_CANDS[0] and Vp not in v_cands:
            # Full-vocab tile is always layout-legal (== full array dim).
            v_cands = (Vp,) + v_cands
        if not v_cands:
            v_cands = (Vp,)

    if tile_k is not None:
        k_cands = (tile_k,)
    else:
        # Full hidden dim first; otherwise lane-aligned exact divisors of H so
        # the K reduction never sees padded-garbage columns.
        k_cands = (H,) + tuple(c for c in _K_CANDS if c < H and H % c == 0)

    # Prefer the largest vocab tile (lane-dense stores, long contiguous weight
    # DMA runs), then the largest K tile that fits the VMEM budget.
    for v in v_cands:
        for k in k_cands:
            need = _tile_vmem_bytes(tile_t, v, k, x_bytes, w_bytes, o_bytes, b_bytes)
            if need <= vmem_budget_bytes:
                return tile_t, v, k
    return tile_t, v_cands[-1], k_cands[-1]


# ----------------------------- wrapper -------------------------------------


def lm_head_logits(x, weight_t, bias=None, *, tile_t=None, tile_v=None,
                   tile_k=None, out_dtype=jnp.float32,
                   vmem_budget_bytes=40 * 1024 * 1024):
    """logits = x @ weight_t (+ bias) with a Pallas kernel.

    x:        [T, H]
    weight_t: [H, Vp]  pre-transposed weight (Vp = padded vocab)
    bias:     [Vp] or None
    returns:  [T, Vp] in `out_dtype`
    """
    T, H = x.shape
    H2, Vp = weight_t.shape
    assert H == H2, "hidden dim mismatch"

    x_bytes = jnp.dtype(x.dtype).itemsize
    w_bytes = jnp.dtype(weight_t.dtype).itemsize
    o_bytes = jnp.dtype(out_dtype).itemsize
    has_bias = bias is not None
    b_bytes = jnp.dtype(bias.dtype).itemsize if has_bias else 0

    tile_t, tile_v, tile_k = _choose_tiles(
        T, H, Vp, x_bytes, w_bytes, o_bytes, b_bytes,
        tile_t, tile_v, tile_k, vmem_budget_bytes)

    grid_t = pl.cdiv(T, tile_t)
    grid_v = pl.cdiv(Vp, tile_v)
    grid_k = pl.cdiv(H, tile_k)
    multi_k = grid_k > 1
    if multi_k:
        # Ragged last-K-tile garbage would corrupt the reduction; the tile
        # chooser only emits divisors, but guard explicit overrides too.
        assert H % tile_k == 0, "hidden-dim tile must divide H when K is split"

    in_specs = [
        pl.BlockSpec((tile_t, tile_k), lambda t, v, k: (t, k)),   # activations
        pl.BlockSpec((tile_k, tile_v), lambda t, v, k: (k, v)),   # weight (MXU RHS)
    ]
    args = [x, weight_t]
    if has_bias:
        in_specs.append(pl.BlockSpec((1, tile_v), lambda t, v, k: (0, v)))
        args.append(bias.reshape(1, Vp))

    scratch_shapes = []
    if multi_k:
        scratch_shapes.append(pltpu.VMEM((tile_t, tile_v), jnp.float32))

    kernel = _make_kernel(has_bias, multi_k)

    vmem_need = _tile_vmem_bytes(tile_t, tile_v, tile_k,
                                 x_bytes, w_bytes, o_bytes, b_bytes)
    # Fits v7x (64 MiB physical VMEM) with headroom; plenty under v5e/v6e.
    vmem_limit = min(max(vmem_need + (8 << 20), 32 << 20), 56 << 20)

    bytes_accessed = (
        T * H * x_bytes + H * Vp * w_bytes + Vp * b_bytes + T * Vp * o_bytes
    )
    cost = pl.CostEstimate(
        flops=2 * T * Vp * H, transcendentals=0, bytes_accessed=bytes_accessed
    )

    return pl.pallas_call(
        kernel,
        out_shape=jax.ShapeDtypeStruct((T, Vp), out_dtype),
        grid_spec=pltpu.PrefetchScalarGridSpec(
            num_scalar_prefetch=0,
            grid=(grid_t, grid_v, grid_k),            # reduction axis last
            in_specs=in_specs,
            out_specs=pl.BlockSpec((tile_t, tile_v), lambda t, v, k: (t, v)),
            scratch_shapes=scratch_shapes,
        ),
        compiler_params=pltpu.CompilerParams(
            dimension_semantics=("parallel", "parallel", "arbitrary"),
            vmem_limit_bytes=vmem_limit,
        ),
        cost_estimate=cost,
    )(*args)


# ----------------------------- module --------------------------------------


class ParallelLMHead:
    """JAX/Pallas port of the vLLM ParallelLMHead (tp_size = 1)."""

    def __init__(self, num_embeddings: int, embedding_dim: int, bias: bool = False,
                 params_dtype=jnp.float32, key=None):
        self.num_embeddings = num_embeddings
        self.num_embeddings_padded = pad_vocab_size(num_embeddings)
        self.embedding_dim = embedding_dim
        self.tp_size = 1
        self.vocab_start_index = 0
        self.vocab_end_index = self.num_embeddings_padded
        self.num_embeddings_per_partition = (
            self.vocab_end_index - self.vocab_start_index
        )
        if key is None:
            key = jax.random.PRNGKey(0)
        wkey, bkey = jax.random.split(key)

        Vp, H = self.num_embeddings_per_partition, self.embedding_dim
        # Deterministic synthetic parameters (module __init__ only gives shapes).
        # Padded vocab rows are zeroed so their logits are deterministic.
        w = jax.random.normal(wkey, (self.num_embeddings, H), jnp.float32) * 0.02
        w = jnp.pad(w, ((0, Vp - self.num_embeddings), (0, 0)))
        # Store pre-transposed [H, Vp]: MXU-native RHS, simple strided weight DMA.
        self.weight_t = jnp.asarray(w.T, dtype=params_dtype)

        if bias:
            b = jax.random.normal(bkey, (self.num_embeddings,), jnp.float32) * 0.01
            self.bias = jnp.pad(b, (0, Vp - self.num_embeddings)).astype(params_dtype)
        else:
            self.bias = None

    def forward(self, input_):
        # Faithful to the PyTorch module: forward is not a valid entry point.
        del input_
        raise RuntimeError("LMHead's weights should be used in the sampler.")

    def compute_logits(self, hidden_states, out_dtype=jnp.float32):
        # This is how the Sampler uses the LM head's weights.
        # TODO(synk): downstream sampler must mask logits[:, num_embeddings:]
        # (the padded vocab slots) to -inf before sampling, as vLLM does.
        return lm_head_logits(
            hidden_states, self.weight_t, self.bias, out_dtype=out_dtype
        )


# ----------------------------- demo / check ---------------------------------


if __name__ == "__main__":
    key = jax.random.PRNGKey(0)
    k_x, k_p = jax.random.split(key)

    vocab_size = 1000            # padded to 1024 (multiple of 64)
    hidden = 128
    seq = 8

    # f32 parameters (single-K-block, scratch-free kernel path).
    head = ParallelLMHead(vocab_size, hidden, bias=True,
                          params_dtype=jnp.float32, key=k_p)
    x = jax.random.normal(k_x, (seq, hidden), dtype=jnp.float32)

    logits = jax.block_until_ready(head.compute_logits(x))
    ref = (
        jnp.dot(x, head.weight_t, precision=jax.lax.Precision.HIGHEST)
        + head.bias[None, :]
    )
    assert logits.shape == (seq, head.num_embeddings_padded)
    assert jnp.allclose(logits, ref, atol=1e-3, rtol=1e-3)

    # bf16 weight/activation streaming (halves the dominant HBM weight stream)
    # with f32 MXU accumulation inside the kernel.
    head_bf = ParallelLMHead(vocab_size, hidden, bias=True,
                             params_dtype=jnp.bfloat16, key=k_p)
    x_bf = x.astype(jnp.bfloat16)
    logits_bf = jax.block_until_ready(head_bf.compute_logits(x_bf))
    ref_bf = (
        jnp.dot(x_bf.astype(jnp.float32), head_bf.weight_t.astype(jnp.float32),
                precision=jax.lax.Precision.HIGHEST)
        + head_bf.bias.astype(jnp.float32)[None, :]
    )
    assert logits_bf.shape == (seq, head_bf.num_embeddings_padded)
    assert jnp.allclose(logits_bf, ref_bf, atol=5e-2, rtol=5e-2)

    # Exercise the hidden-dim (K) reduction grid path with the accumulator.
    H2, V2, T2 = 256, 512, 8
    kx2, kw2, kb2 = jax.random.split(k_p, 3)
    x2 = jax.random.normal(kx2, (T2, H2), jnp.float32)
    w2_t = jax.random.normal(kw2, (H2, V2), jnp.float32) * 0.02
    b2 = jax.random.normal(kb2, (V2,), jnp.float32) * 0.01
    logits2 = jax.block_until_ready(
        lm_head_logits(x2, w2_t, b2, tile_v=256, tile_k=128))
    ref2 = jnp.dot(x2, w2_t, precision=jax.lax.Precision.HIGHEST) + b2[None, :]
    assert logits2.shape == (T2, V2)
    assert jnp.allclose(logits2, ref2, atol=1e-3, rtol=1e-3)

    print("KERNEL_OK")
</pallas_src>

<mosaic_0001>
module attributes {stable_mosaic.version = 11 : i64} {
  func.func @kernel(%arg0: i32, %arg1: i32, %arg2: i32, %arg3: memref<8x128xf32, #tpu.memory_space<vmem>>, %arg4: memref<128x1024xf32, #tpu.memory_space<vmem>>, %arg5: memref<1x1024xf32, #tpu.memory_space<vmem>>, %arg6: memref<8x1024xf32, #tpu.memory_space<vmem>>) attributes {dimension_semantics = [#tpu.dimension_semantics<parallel>, #tpu.dimension_semantics<parallel>, #tpu.dimension_semantics<arbitrary>], iteration_bounds = array<i64: 1, 1, 1>, scalar_prefetch = 0 : i64, scratch_operands = 0 : i64, tpu.core_type = #tpu.core_type<tc>, window_params = [{transform_indices = @transform_0, window_bounds = array<i64: 8, 128>}, {transform_indices = @transform_1, window_bounds = array<i64: 128, 1024>}, {transform_indices = @transform_2, window_bounds = array<i64: 1, 1024>}, {transform_indices = @transform_3, window_bounds = array<i64: 8, 1024>}]} {
    %c0 = arith.constant 0 : index
    %c0_0 = arith.constant 0 : index
    %0 = vector.load %arg3[%c0, %c0_0] : memref<8x128xf32, #tpu.memory_space<vmem>>, vector<8x128xf32>
    %c0_1 = arith.constant 0 : index
    %c0_2 = arith.constant 0 : index
    %1 = vector.load %arg4[%c0_1, %c0_2] : memref<128x1024xf32, #tpu.memory_space<vmem>>, vector<128x1024xf32>
    %cst = arith.constant dense<0.000000e+00> : vector<8x1024xf32>
    %2 = tpu.matmul %0, %1, %cst {dimension_numbers = #tpu.dot_dimension_numbers<[1], [0], [0], [1], [0, 0, 1, 1], [], []>} : vector<8x128xf32>, vector<128x1024xf32>, vector<8x1024xf32> -> vector<8x1024xf32>
    %c0_3 = arith.constant 0 : index
    %c0_4 = arith.constant 0 : index
    %3 = vector.load %arg5[%c0_3, %c0_4] : memref<1x1024xf32, #tpu.memory_space<vmem>>, vector<1x1024xf32>
    %4 = vector.broadcast %3 : vector<1x1024xf32> to vector<8x1024xf32>
    %5 = arith.addf %2, %4 : vector<8x1024xf32>
    %c0_5 = arith.constant 0 : index
    %c0_6 = arith.constant 0 : index
    %6 = vector.load %arg6[%c0_5, %c0_6] : memref<8x1024xf32, #tpu.memory_space<vmem>>, vector<8x1024xf32>
    tpu.vector_store %arg6[%c0_5, %c0_6], %5 {strides = array<i32>} : memref<8x1024xf32, #tpu.memory_space<vmem>>, vector<8x1024xf32>,
    return
  }
  func.func @transform_0(%arg0: i32, %arg1: i32, %arg2: i32) -> (i32, i32) {
    %c0_i32 = arith.constant 0 : i32
    return %arg0, %arg2 : i32, i32
  }
  func.func @transform_1(%arg0: i32, %arg1: i32, %arg2: i32) -> (i32, i32) {
    %c0_i32 = arith.constant 0 : i32
    return %arg2, %arg1 : i32, i32
  }
  func.func @transform_2(%arg0: i32, %arg1: i32, %arg2: i32) -> (i32, i32) {
    %c0_i32 = arith.constant 0 : i32
    %c0_i32_0 = arith.constant 0 : i32
    return %c0_i32, %arg1 : i32, i32
  }
  func.func @transform_3(%arg0: i32, %arg1: i32, %arg2: i32) -> (i32, i32) {
    %c0_i32 = arith.constant 0 : i32
    return %arg0, %arg1 : i32, i32
  }
}

</mosaic_0001>

<llo_original>
// kernel: tpu_custom_call.1
$region0: #{tpu_custom_call.1}
  #allocation0 [shape = 'u32[]', space=smem, size = 0x4, offset = 0x4, fixed_abs, tag = 'smem constant byte address 0x4 - core index']
  #allocation1 [shape = 'u32[144,128]{1,0:T(1,128)}', space=vmem, size = 0x12000, scoped, tag = 'internal scratch']
  %s0 = inlined_call_operand.hbm [shape: f32[8,128], index: 0, kind: input, shape index: {}]
  %s1 = inlined_call_operand.hbm [shape: f32[128,1024], index: 1, kind: input, shape index: {}]
  %s2 = inlined_call_operand.hbm [shape: f32[1,1024], index: 2, kind: input, shape index: {}]
  %s3 = inlined_call_operand.hbm [shape: f32[8,1024], index: 3, kind: output, shape index: {}]
  %s4 = sld [smem:[#allocation0]]
  $region34: #{tpu_custom_call.1} parent=0
    _
  %s6 = ssub.s32 1, %s4
  %s7 = scalar_select 0, %s6, %s4
  $region1: #{tpu_custom_call.1} parent=0
    #allocation2 [shape = 'u8[4096]{0}', space=vmem, size = 0x1000, scoped, tag = 'input window, operand 0, single buffered']
    #allocation3 [shape = 's32[1]{0}', space=sflag, size = 0x4, scoped, tag = 'scoped memory for tpu_custom_call.1']
    #allocation4 [shape = 's32[1]{0}', space=sflag, size = 0x4, scoped, tag = 'scoped memory for tpu_custom_call.1']
    #allocation5 [shape = 'u8[524288]{0}', space=vmem, size = 0x80000, scoped, tag = 'input window, operand 1, single buffered']
    #allocation6 [shape = 's32[1]{0}', space=sflag, size = 0x4, scoped, tag = 'scoped memory for tpu_custom_call.1']
    #allocation7 [shape = 'u8[4096]{0}', space=vmem, size = 0x1000, scoped, tag = 'input window, operand 2, single buffered']
    #allocation8 [shape = 'u8[32768]{0}', space=vmem, size = 0x8000, scoped, tag = 'output window, operand 0, single buffered']
    %8 = vsyncpa [#allocation3], 0
    %9 = vsyncpa [#allocation6], 0
    %10 = vsyncpa [#allocation4], 0
    // Predicated region
    $region2: #{tpu_custom_call.1} parent=1 // pred_check
      _
    $region3: #{tpu_custom_call.1} parent=1 // pred_check_branch
      %12 = sbr.rel (0) target = $region5
    $region4: #{tpu_custom_call.1} parent=1 // pred_region
      %s14 = ssub.s32 128, 128
      %15 = vsyncadd [#allocation3], %s14
      %s17 = sshll.u32 [#allocation2], 4
      %s18 = int_to_ptr.vmem [resolvable:$true] %s17
      %20 = dma.hbm_to_vmem [thread:$0]  %s0, 128, %s18, [#allocation3]
    $region5: #{tpu_custom_call.1} parent=1 // pred_fallthru
      _
    // Predicated region
    $region6: #{tpu_custom_call.1} parent=1 // pred_check
      _
    $region7: #{tpu_custom_call.1} parent=1 // pred_check_branch
      %22 = sbr.rel (0) target = $region9
    $region8: #{tpu_custom_call.1} parent=1 // pred_region
      %s24 = ssub.s32 16384, 16384
      %25 = vsyncadd [#allocation6], %s24
      %s26 = sshll.u32 [#allocation5], 4
      %s27 = int_to_ptr.vmem [resolvable:$true] %s26
      %32 = dma.hbm_to_vmem [thread:$0]  %s1, 16384, %s27, [#allocation6], 1024, 1024, 64
    $region9: #{tpu_custom_call.1} parent=1 // pred_fallthru
      _
    // Predicated region
    $region10: #{tpu_custom_call.1} parent=1 // pred_check
      _
    $region11: #{tpu_custom_call.1} parent=1 // pred_check_branch
      %34 = sbr.rel (0) target = $region13
    $region12: #{tpu_custom_call.1} parent=1 // pred_region
      %s36 = ssub.s32 128, 128
      %37 = vsyncadd [#allocation6], %s36
      %s39 = sshll.u32 [#allocation7], 4
      %s40 = int_to_ptr.vmem [resolvable:$true] %s39
      %42 = dma.hbm_to_vmem [thread:$0]  %s2, 128, %s40, [#allocation6]
    $region13: #{tpu_custom_call.1} parent=1 // pred_fallthru
      _
    // Predicated region
    $region14: #{tpu_custom_call.1} parent=1 // pred_check
      _
    $region15: #{tpu_custom_call.1} parent=1 // pred_check_branch
      %44 = sbr.rel (0) target = $region17
    $region16: #{tpu_custom_call.1} parent=1 // pred_region
      %45 = dma.done [#allocation3], 128
    $region17: #{tpu_custom_call.1} parent=1 // pred_fallthru
      _
    // Predicated region
    $region18: #{tpu_custom_call.1} parent=1 // pred_check
      _
    $region19: #{tpu_custom_call.1} parent=1 // pred_check_branch
      %47 = sbr.rel (0) target = $region21
    $region20: #{tpu_custom_call.1} parent=1 // pred_region
      %48 = dma.done [#allocation6], 16384
    $region21: #{tpu_custom_call.1} parent=1 // pred_fallthru
      _
    // Predicated region
    $region22: #{tpu_custom_call.1} parent=1 // pred_check
      _
    $region23: #{tpu_custom_call.1} parent=1 // pred_check_branch
      %50 = sbr.rel (0) target = $region25
    $region24: #{tpu_custom_call.1} parent=1 // pred_region
      %51 = dma.done [#allocation6], 128
    $region25: #{tpu_custom_call.1} parent=1 // pred_fallthru
      _
    %v52 = vld [vmem:[#allocation2] sm:$0xff]
    %v53 = vld [vmem:[#allocation5] sm:$0xff]
    %v54 = vld [vmem:[#allocation5 + $0x8] sm:$0xff]
    %v55 = vld [vmem:[#allocation5 + $0x10] sm:$0xff]
    %v56 = vld [vmem:[#allocation5 + $0x18] sm:$0xff]
    %v57 = vld [vmem:[#allocation5 + $0x20] sm:$0xff]
    %v58 = vld [vmem:[#allocation5 + $0x28] sm:$0xff]
    %v59 = vld [vmem:[#allocation5 + $0x30] sm:$0xff]
    %v60 = vld [vmem:[#allocation5 + $0x38] sm:$0xff]
    %v61 = vld [vmem:[#allocation5 + $0x40] sm:$0xff]
    %v62 = vld [vmem:[#allocation5 + $0x48] sm:$0xff]
    %v63 = vld [vmem:[#allocation5 + $0x50] sm:$0xff]
    %v64 = vld [vmem:[#allocation5 + $0x58] sm:$0xff]
    %v65 = vld [vmem:[#allocation5 + $0x60] sm:$0xff]
    %v66 = vld [vmem:[#allocation5 + $0x68] sm:$0xff]
    %v67 = vld [vmem:[#allocation5 + $0x70] sm:$0xff]
    %v68 = vld [vmem:[#allocation5 + $0x78] sm:$0xff]
    %v69 = vld [vmem:[#allocation5 + $0x80] sm:$0xff]
    %v70 = vld [vmem:[#allocation5 + $0x88] sm:$0xff]
    %v71 = vld [vmem:[#allocation5 + $0x90] sm:$0xff]
    %v72 = vld [vmem:[#allocation5 + $0x98] sm:$0xff]
    %v73 = vld [vmem:[#allocation5 + $0xa0] sm:$0xff]
    %v74 = vld [vmem:[#allocation5 + $0xa8] sm:$0xff]
    %v75 = vld [vmem:[#allocation5 + $0xb0] sm:$0xff]
    %v76 = vld [vmem:[#allocation5 + $0xb8] sm:$0xff]
    %v77 = vld [vmem:[#allocation5 + $0xc0] sm:$0xff]
    %v78 = vld [vmem:[#allocation5 + $0xc8] sm:$0xff]
    %v79 = vld [vmem:[#allocation5 + $0xd0] sm:$0xff]
    %v80 = vld [vmem:[#allocation5 + $0xd8] sm:$0xff]
    %v81 = vld [vmem:[#allocation5 + $0xe0] sm:$0xff]
    %v82 = vld [vmem:[#allocation5 + $0xe8] sm:$0xff]
    %v83 = vld [vmem:[#allocation5 + $0xf0] sm:$0xff]
    %v84 = vld [vmem:[#allocation5 + $0xf8] sm:$0xff]
    %v85 = vld [vmem:[#allocation5 + $0x100] sm:$0xff]
    %v86 = vld [vmem:[#allocation5 + $0x108] sm:$0xff]
    %v87 = vld [vmem:[#allocation5 + $0x110] sm:$0xff]
    %v88 = vld [vmem:[#allocation5 + $0x118] sm:$0xff]
    %v89 = vld [vmem:[#allocation5 + $0x120] sm:$0xff]
    %v90 = vld [vmem:[#allocation5 + $0x128] sm:$0xff]
    %v91 = vld [vmem:[#allocation5 + $0x130] sm:$0xff]
    %v92 = vld [vmem:[#allocation5 + $0x138] sm:$0xff]
    %v93 = vld [vmem:[#allocation5 + $0x140] sm:$0xff]
    %v94 = vld [vmem:[#allocation5 + $0x148] sm:$0xff]
    %v95 = vld [vmem:[#allocation5 + $0x150] sm:$0xff]
    %v96 = vld [vmem:[#allocation5 + $0x158] sm:$0xff]
    %v97 = vld [vmem:[#allocation5 + $0x160] sm:$0xff]
    %v98 = vld [vmem:[#allocation5 + $0x168] sm:$0xff]
    %v99 = vld [vmem:[#allocation5 + $0x170] sm:$0xff]
    %v100 = vld [vmem:[#allocation5 + $0x178] sm:$0xff]
    %v101 = vld [vmem:[#allocation5 + $0x180] sm:$0xff]
    %v102 = vld [vmem:[#allocation5 + $0x188] sm:$0xff]
    %v103 = vld [vmem:[#allocation5 + $0x190] sm:$0xff]
    %v104 = vld [vmem:[#allocation5 + $0x198] sm:$0xff]
    %v105 = vld [vmem:[#allocation5 + $0x1a0] sm:$0xff]
    %v106 = vld [vmem:[#allocation5 + $0x1a8] sm:$0xff]
    %v107 = vld [vmem:[#allocation5 + $0x1b0] sm:$0xff]
    %v108 = vld [vmem:[#allocation5 + $0x1b8] sm:$0xff]
    %v109 = vld [vmem:[#allocation5 + $0x1c0] sm:$0xff]
    %v110 = vld [vmem:[#allocation5 + $0x1c8] sm:$0xff]
    %v111 = vld [vmem:[#allocation5 + $0x1d0] sm:$0xff]
    %v112 = vld [vmem:[#allocation5 + $0x1d8] sm:$0xff]
    %v113 = vld [vmem:[#allocation5 + $0x1e0] sm:$0xff]
    %v114 = vld [vmem:[#allocation5 + $0x1e8] sm:$0xff]
    %v115 = vld [vmem:[#allocation5 + $0x1f0] sm:$0xff]
    %v116 = vld [vmem:[#allocation5 + $0x1f8] sm:$0xff]
    %v117 = vld [vmem:[#allocation5 + $0x200] sm:$0xff]
    %v118 = vld [vmem:[#allocation5 + $0x208] sm:$0xff]
    %v119 = vld [vmem:[#allocation5 + $0x210] sm:$0xff]
    %v120 = vld [vmem:[#allocation5 + $0x218] sm:$0xff]
    %v121 = vld [vmem:[#allocation5 + $0x220] sm:$0xff]
    %v122 = vld [vmem:[#allocation5 + $0x228] sm:$0xff]
    %v123 = vld [vmem:[#allocation5 + $0x230] sm:$0xff]
    %v124 = vld [vmem:[#allocation5 + $0x238] sm:$0xff]
    %v125 = vld [vmem:[#allocation5 + $0x240] sm:$0xff]
    %v126 = vld [vmem:[#allocation5 + $0x248] sm:$0xff]
    %v127 = vld [vmem:[#allocation5 + $0x250] sm:$0xff]
    %v128 = vld [vmem:[#allocation5 + $0x258] sm:$0xff]
    %v129 = vld [vmem:[#allocation5 + $0x260] sm:$0xff]
    %v130 = vld [vmem:[#allocation5 + $0x268] sm:$0xff]
    %v131 = vld [vmem:[#allocation5 + $0x270] sm:$0xff]
    %v132 = vld [vmem:[#allocation5 + $0x278] sm:$0xff]
    %v133 = vld [vmem:[#allocation5 + $0x280] sm:$0xff]
    %v134 = vld [vmem:[#allocation5 + $0x288] sm:$0xff]
    %v135 = vld [vmem:[#allocation5 + $0x290] sm:$0xff]
    %v136 = vld [vmem:[#allocation5 + $0x298] sm:$0xff]
    %v137 = vld [vmem:[#allocation5 + $0x2a0] sm:$0xff]
    %v138 = vld [vmem:[#allocation5 + $0x2a8] sm:$0xff]
    %v139 = vld [vmem:[#allocation5 + $0x2b0] sm:$0xff]
    %v140 = vld [vmem:[#allocation5 + $0x2b8] sm:$0xff]
    %v141 = vld [vmem:[#allocation5 + $0x2c0] sm:$0xff]
    %v142 = vld [vmem:[#allocation5 + $0x2c8] sm:$0xff]
    %v143 = vld [vmem:[#allocation5 + $0x2d0] sm:$0xff]
    %v144 = vld [vmem:[#allocation5 + $0x2d8] sm:$0xff]
    %v145 = vld [vmem:[#allocation5 + $0x2e0] sm:$0xff]
    %v146 = vld [vmem:[#allocation5 + $0x2e8] sm:$0xff]
    %v147 = vld [vmem:[#allocation5 + $0x2f0] sm:$0xff]
    %v148 = vld [vmem:[#allocation5 + $0x2f8] sm:$0xff]
    %v149 = vld [vmem:[#allocation5 + $0x300] sm:$0xff]
    %v150 = vld [vmem:[#allocation5 + $0x308] sm:$0xff]
    %v151 = vld [vmem:[#allocation5 + $0x310] sm:$0xff]
    %v152 = vld [vmem:[#allocation5 + $0x318] sm:$0xff]
    %v153 = vld [vmem:[#allocation5 + $0x320] sm:$0xff]
    %v154 = vld [vmem:[#allocation5 + $0x328] sm:$0xff]
    %v155 = vld [vmem:[#allocation5 + $0x330] sm:$0xff]
    %v156 = vld [vmem:[#allocation5 + $0x338] sm:$0xff]
    %v157 = vld [vmem:[#allocation5 + $0x340] sm:$0xff]
    %v158 = vld [vmem:[#allocation5 + $0x348] sm:$0xff]
    %v159 = vld [vmem:[#allocation5 + $0x350] sm:$0xff]
    %v160 = vld [vmem:[#allocation5 + $0x358] sm:$0xff]
    %v161 = vld [vmem:[#allocation5 + $0x360] sm:$0xff]
    %v162 = vld [vmem:[#allocation5 + $0x368] sm:$0xff]
    %v163 = vld [vmem:[#allocation5 + $0x370] sm:$0xff]
    %v164 = vld [vmem:[#allocation5 + $0x378] sm:$0xff]
    %v165 = vld [vmem:[#allocation5 + $0x380] sm:$0xff]
    %v166 = vld [vmem:[#allocation5 + $0x388] sm:$0xff]
    %v167 = vld [vmem:[#allocation5 + $0x390] sm:$0xff]
    %v168 = vld [vmem:[#allocation5 + $0x398] sm:$0xff]
    %v169 = vld [vmem:[#allocation5 + $0x3a0] sm:$0xff]
    %v170 = vld [vmem:[#allocation5 + $0x3a8] sm:$0xff]
    %v171 = vld [vmem:[#allocation5 + $0x3b0] sm:$0xff]
    %v172 = vld [vmem:[#allocation5 + $0x3b8] sm:$0xff]
    %v173 = vld [vmem:[#allocation5 + $0x3c0] sm:$0xff]
    %v174 = vld [vmem:[#allocation5 + $0x3c8] sm:$0xff]
    %v175 = vld [vmem:[#allocation5 + $0x3d0] sm:$0xff]
    %v176 = vld [vmem:[#allocation5 + $0x3d8] sm:$0xff]
    %v177 = vld [vmem:[#allocation5 + $0x3e0] sm:$0xff]
    %v178 = vld [vmem:[#allocation5 + $0x3e8] sm:$0xff]
    %v179 = vld [vmem:[#allocation5 + $0x3f0] sm:$0xff]
    %v180 = vld [vmem:[#allocation5 + $0x3f8] sm:$0xff]
    %v181 = vld [vmem:[#allocation7] sm:$0xff]
    %v183 = vlaneseq
    %v184 = vshrl.u32 %v183, 7
    %v185 = vsub.s32 0, %v184
    %v186 = vrot.slane %v181, %v185
    %v187 = vlaneseq
    %v188 = vshrl.u32 %v187, 7
    %v189 = vsub.s32 1, %v188
    %v190 = vrot.slane %v181, %v189
    %v191 = vlaneseq
    %v192 = vshrl.u32 %v191, 7
    %v193 = vsub.s32 2, %v192
    %v194 = vrot.slane %v181, %v193
    %v195 = vlaneseq
    %v196 = vshrl.u32 %v195, 7
    %v197 = vsub.s32 3, %v196
    %v198 = vrot.slane %v181, %v197
    %v199 = vlaneseq
    %v200 = vshrl.u32 %v199, 7
    %v201 = vsub.s32 4, %v200
    %v202 = vrot.slane %v181, %v201
    %v203 = vlaneseq
    %v204 = vshrl.u32 %v203, 7
    %v205 = vsub.s32 5, %v204
    %v206 = vrot.slane %v181, %v205
    %v207 = vlaneseq
    %v208 = vshrl.u32 %v207, 7
    %v209 = vsub.s32 6, %v208
    %v210 = vrot.slane %v181, %v209
    %v211 = vlaneseq
    %v212 = vshrl.u32 %v211, 7
    %v213 = vsub.s32 7, %v212
    %v214 = vrot.slane %v181, %v213
    %223 = vmatprep.subr.mxu0 %v54
    %224 = vmatpush1.msra.mxu0 %v53
    %225 = vmatprep.subr.mxu0 %v62
    %226 = vmatpush1.msra.mxu0 %v61
    %227 = vmatprep.subr.mxu0 %v70
    %228 = vmatpush1.msra.mxu0 %v69
    %229 = vmatprep.subr.mxu0 %v78
    %230 = vmatpush1.msra.mxu0 %v77
    %231 = vmatprep.subr.mxu0 %v86
    %232 = vmatpush1.msra.mxu0 %v85
    %233 = vmatprep.subr.mxu0 %v94
    %234 = vmatpush1.msra.mxu0 %v93
    %235 = vmatprep.subr.mxu0 %v102
    %236 = vmatpush1.msra.mxu0 %v101
    %237 = vmatprep.subr.mxu0 %v110
    %238 = vmatpush1.msra.mxu0 %v109
    %239 = vmatprep.subr.mxu0 %v118
    %240 = vmatpush1.msra.mxu0 %v117
    %241 = vmatprep.subr.mxu0 %v126
    %242 = vmatpush1.msra.mxu0 %v125
    %243 = vmatprep.subr.mxu0 %v134
    %244 = vmatpush1.msra.mxu0 %v133
    %245 = vmatprep.subr.mxu0 %v142
    %246 = vmatpush1.msra.mxu0 %v141
    %247 = vmatprep.subr.mxu0 %v150
    %248 = vmatpush1.msra.mxu0 %v149
    %249 = vmatprep.subr.mxu0 %v158
    %250 = vmatpush1.msra.mxu0 %v157
    %251 = vmatprep.subr.mxu0 %v166
    %252 = vmatpush1.msra.mxu0 %v165
    %253 = vmatprep.subr.mxu0 %v174
    %254 = vmatpush1.msra.mxu0 %v173
    %255 = vmatprep.subr.mxu0 0.0
    %256 = vmatpush1.msra.mxu0 0.0
    %257 = vmatprep.subr.mxu0 0.0
    %258 = vmatpush1.msra.mxu0 0.0
    %259 = vmatprep.subr.mxu0 0.0
    %260 = vmatpush1.msra.mxu0 0.0
    %261 = vmatprep.subr.mxu0 0.0
    %262 = vmatpush1.msra.mxu0 0.0
    %263 = vmatprep.subr.mxu0 0.0
    %264 = vmatpush1.msra.mxu0 0.0
    %265 = vmatprep.subr.mxu0 0.0
    %266 = vmatpush1.msra.mxu0 0.0
    %267 = vmatprep.subr.mxu0 0.0
    %268 = vmatpush1.msra.mxu0 0.0
    %269 = vmatprep.subr.mxu0 0.0
    %270 = vmatpush1.msra.mxu0 0.0
    %271 = vmatprep.subr.mxu0 0.0
    %272 = vmatpush1.msra.mxu0 0.0
    %273 = vmatprep.subr.mxu0 0.0
    %274 = vmatpush1.msra.mxu0 0.0
    %275 = vmatprep.subr.mxu0 0.0
    %276 = vmatpush1.msra.mxu0 0.0
    %277 = vmatprep.subr.mxu0 0.0
    %278 = vmatpush1.msra.mxu0 0.0
    %279 = vmatprep.subr.mxu0 0.0
    %280 = vmatpush1.msra.mxu0 0.0
    %281 = vmatprep.subr.mxu0 0.0
    %282 = vmatpush1.msra.mxu0 0.0
    %283 = vmatprep.subr.mxu0 0.0
    %284 = vmatpush1.msra.mxu0 0.0
    %285 = vmatprep.subr.mxu0 0.0
    %286 = vmatpush1.msra.mxu0 0.0
    %287 = vmatprep.mubr.f32.mxu0 0.0
    %288 = vmatmul.mubr.f32.gmra.mrb[0].mxu0 %v52
    %v289 = vpop.f32.mrb[0].mxu0
    %v290 = vadd.f32 %v186, %v289
    %v291 = vpop.f32.mrb[0].mxu0
    %v292 = vadd.f32 %v190, %v291
    %293 = vdwg.mxu0
    %294 = vmatprep.subr.mxu0 %v56
    %295 = vmatpush1.msra.mxu0 %v55
    %296 = vmatprep.subr.mxu0 %v64
    %297 = vmatpush1.msra.mxu0 %v63
    %298 = vmatprep.subr.mxu0 %v72
    %299 = vmatpush1.msra.mxu0 %v71
    %300 = vmatprep.subr.mxu0 %v80
    %301 = vmatpush1.msra.mxu0 %v79
    %302 = vmatprep.subr.mxu0 %v88
    %303 = vmatpush1.msra.mxu0 %v87
    %304 = vmatprep.subr.mxu0 %v96
    %305 = vmatpush1.msra.mxu0 %v95
    %306 = vmatprep.subr.mxu0 %v104
    %307 = vmatpush1.msra.mxu0 %v103
    %308 = vmatprep.subr.mxu0 %v112
    %309 = vmatpush1.msra.mxu0 %v111
    %310 = vmatprep.subr.mxu0 %v120
    %311 = vmatpush1.msra.mxu0 %v119
    %312 = vmatprep.subr.mxu0 %v128
    %313 = vmatpush1.msra.mxu0 %v127
    %314 = vmatprep.subr.mxu0 %v136
    %315 = vmatpush1.msra.mxu0 %v135
    %316 = vmatprep.subr.mxu0 %v144
    %317 = vmatpush1.msra.mxu0 %v143
    %318 = vmatprep.subr.mxu0 %v152
    %319 = vmatpush1.msra.mxu0 %v151
    %320 = vmatprep.subr.mxu0 %v160
    %321 = vmatpush1.msra.mxu0 %v159
    %322 = vmatprep.subr.mxu0 %v168
    %323 = vmatpush1.msra.mxu0 %v167
    %324 = vmatprep.subr.mxu0 %v176
    %325 = vmatpush1.msra.mxu0 %v175
    %326 = vmatprep.subr.mxu0 0.0
    %327 = vmatpush1.msra.mxu0 0.0
    %328 = vmatprep.subr.mxu0 0.0
    %329 = vmatpush1.msra.mxu0 0.0
    %330 = vmatprep.subr.mxu0 0.0
    %331 = vmatpush1.msra.mxu0 0.0
    %332 = vmatprep.subr.mxu0 0.0
    %333 = vmatpush1.msra.mxu0 0.0
    %334 = vmatprep.subr.mxu0 0.0
    %335 = vmatpush1.msra.mxu0 0.0
    %336 = vmatprep.subr.mxu0 0.0
    %337 = vmatpush1.msra.mxu0 0.0
    %338 = vmatprep.subr.mxu0 0.0
    %339 = vmatpush1.msra.mxu0 0.0
    %340 = vmatprep.subr.mxu0 0.0
    %341 = vmatpush1.msra.mxu0 0.0
    %342 = vmatprep.subr.mxu0 0.0
    %343 = vmatpush1.msra.mxu0 0.0
    %344 = vmatprep.subr.mxu0 0.0
    %345 = vmatpush1.msra.mxu0 0.0
    %346 = vmatprep.subr.mxu0 0.0
    %347 = vmatpush1.msra.mxu0 0.0
    %348 = vmatprep.subr.mxu0 0.0
    %349 = vmatpush1.msra.mxu0 0.0
    %350 = vmatprep.subr.mxu0 0.0
    %351 = vmatpush1.msra.mxu0 0.0
    %352 = vmatprep.subr.mxu0 0.0
    %353 = vmatpush1.msra.mxu0 0.0
    %354 = vmatprep.subr.mxu0 0.0
    %355 = vmatpush1.msra.mxu0 0.0
    %356 = vmatprep.subr.mxu0 0.0
    %357 = vmatpush1.msra.mxu0 0.0
    %358 = vmatprep.mubr.f32.mxu0 0.0
    %359 = vmatmul.mubr.f32.gmra.mrb[0].mxu0 %v52
    %v360 = vpop.f32.mrb[0].mxu0
    %v361 = vadd.f32 %v194, %v360
    %v362 = vpop.f32.mrb[0].mxu0
    %v363 = vadd.f32 %v198, %v362
    %364 = vdwg.mxu0
    %365 = vmatprep.subr.mxu0 %v58
    %366 = vmatpush1.msra.mxu0 %v57
    %367 = vmatprep.subr.mxu0 %v66
    %368 = vmatpush1.msra.mxu0 %v65
    %369 = vmatprep.subr.mxu0 %v74
    %370 = vmatpush1.msra.mxu0 %v73
    %371 = vmatprep.subr.mxu0 %v82
    %372 = vmatpush1.msra.mxu0 %v81
    %373 = vmatprep.subr.mxu0 %v90
    %374 = vmatpush1.msra.mxu0 %v89
    %375 = vmatprep.subr.mxu0 %v98
    %376 = vmatpush1.msra.mxu0 %v97
    %377 = vmatprep.subr.mxu0 %v106
    %378 = vmatpush1.msra.mxu0 %v105
    %379 = vmatprep.subr.mxu0 %v114
    %380 = vmatpush1.msra.mxu0 %v113
    %381 = vmatprep.subr.mxu0 %v122
    %382 = vmatpush1.msra.mxu0 %v121
    %383 = vmatprep.subr.mxu0 %v130
    %384 = vmatpush1.msra.mxu0 %v129
    %385 = vmatprep.subr.mxu0 %v138
    %386 = vmatpush1.msra.mxu0 %v137
    %387 = vmatprep.subr.mxu0 %v146
    %388 = vmatpush1.msra.mxu0 %v145
    %389 = vmatprep.subr.mxu0 %v154
    %390 = vmatpush1.msra.mxu0 %v153
    %391 = vmatprep.subr.mxu0 %v162
    %392 = vmatpush1.msra.mxu0 %v161
    %393 = vmatprep.subr.mxu0 %v170
    %394 = vmatpush1.msra.mxu0 %v169
    %395 = vmatprep.subr.mxu0 %v178
    %396 = vmatpush1.msra.mxu0 %v177
    %397 = vmatprep.subr.mxu0 0.0
    %398 = vmatpush1.msra.mxu0 0.0
    %399 = vmatprep.subr.mxu0 0.0
    %400 = vmatpush1.msra.mxu0 0.0
    %401 = vmatprep.subr.mxu0 0.0
    %402 = vmatpush1.msra.mxu0 0.0
    %403 = vmatprep.subr.mxu0 0.0
    %404 = vmatpush1.msra.mxu0 0.0
    %405 = vmatprep.subr.mxu0 0.0
    %406 = vmatpush1.msra.mxu0 0.0
    %407 = vmatprep.subr.mxu0 0.0
    %408 = vmatpush1.msra.mxu0 0.0
    %409 = vmatprep.subr.mxu0 0.0
    %410 = vmatpush1.msra.mxu0 0.0
    %411 = vmatprep.subr.mxu0 0.0
    %412 = vmatpush1.msra.mxu0 0.0
    %413 = vmatprep.subr.mxu0 0.0
    %414 = vmatpush1.msra.mxu0 0.0
    %415 = vmatprep.subr.mxu0 0.0
    %416 = vmatpush1.msra.mxu0 0.0
    %417 = vmatprep.subr.mxu0 0.0
    %418 = vmatpush1.msra.mxu0 0.0
    %419 = vmatprep.subr.mxu0 0.0
    %420 = vmatpush1.msra.mxu0 0.0
    %421 = vmatprep.subr.mxu0 0.0
    %422 = vmatpush1.msra.mxu0 0.0
    %423 = vmatprep.subr.mxu0 0.0
    %424 = vmatpush1.msra.mxu0 0.0
    %425 = vmatprep.subr.mxu0 0.0
    %426 = vmatpush1.msra.mxu0 0.0
    %427 = vmatprep.subr.mxu0 0.0
    %428 = vmatpush1.msra.mxu0 0.0
    %429 = vmatprep.mubr.f32.mxu0 0.0
    %430 = vmatmul.mubr.f32.gmra.mrb[0].mxu0 %v52
    %v431 = vpop.f32.mrb[0].mxu0
    %v432 = vadd.f32 %v202, %v431
    %v433 = vpop.f32.mrb[0].mxu0
    %v434 = vadd.f32 %v206, %v433
    %435 = vdwg.mxu0
    %436 = vmatprep.subr.mxu0 %v60
    %437 = vmatpush1.msra.mxu0 %v59
    %438 = vmatprep.subr.mxu0 %v68
    %439 = vmatpush1.msra.mxu0 %v67
    %440 = vmatprep.subr.mxu0 %v76
    %441 = vmatpush1.msra.mxu0 %v75
    %442 = vmatprep.subr.mxu0 %v84
    %443 = vmatpush1.msra.mxu0 %v83
    %444 = vmatprep.subr.mxu0 %v92
    %445 = vmatpush1.msra.mxu0 %v91
    %446 = vmatprep.subr.mxu0 %v100
    %447 = vmatpush1.msra.mxu0 %v99
    %448 = vmatprep.subr.mxu0 %v108
    %449 = vmatpush1.msra.mxu0 %v107
    %450 = vmatprep.subr.mxu0 %v116
    %451 = vmatpush1.msra.mxu0 %v115
    %452 = vmatprep.subr.mxu0 %v124
    %453 = vmatpush1.msra.mxu0 %v123
    %454 = vmatprep.subr.mxu0 %v132
    %455 = vmatpush1.msra.mxu0 %v131
    %456 = vmatprep.subr.mxu0 %v140
    %457 = vmatpush1.msra.mxu0 %v139
    %458 = vmatprep.subr.mxu0 %v148
    %459 = vmatpush1.msra.mxu0 %v147
    %460 = vmatprep.subr.mxu0 %v156
    %461 = vmatpush1.msra.mxu0 %v155
    %462 = vmatprep.subr.mxu0 %v164
    %463 = vmatpush1.msra.mxu0 %v163
    %464 = vmatprep.subr.mxu0 %v172
    %465 = vmatpush1.msra.mxu0 %v171
    %466 = vmatprep.subr.mxu0 %v180
    %467 = vmatpush1.msra.mxu0 %v179
    %468 = vmatprep.subr.mxu0 0.0
    %469 = vmatpush1.msra.mxu0 0.0
    %470 = vmatprep.subr.mxu0 0.0
    %471 = vmatpush1.msra.mxu0 0.0
    %472 = vmatprep.subr.mxu0 0.0
    %473 = vmatpush1.msra.mxu0 0.0
    %474 = vmatprep.subr.mxu0 0.0
    %475 = vmatpush1.msra.mxu0 0.0
    %476 = vmatprep.subr.mxu0 0.0
    %477 = vmatpush1.msra.mxu0 0.0
    %478 = vmatprep.subr.mxu0 0.0
    %479 = vmatpush1.msra.mxu0 0.0
    %480 = vmatprep.subr.mxu0 0.0
    %481 = vmatpush1.msra.mxu0 0.0
    %482 = vmatprep.subr.mxu0 0.0
    %483 = vmatpush1.msra.mxu0 0.0
    %484 = vmatprep.subr.mxu0 0.0
    %485 = vmatpush1.msra.mxu0 0.0
    %486 = vmatprep.subr.mxu0 0.0
    %487 = vmatpush1.msra.mxu0 0.0
    %488 = vmatprep.subr.mxu0 0.0
    %489 = vmatpush1.msra.mxu0 0.0
    %490 = vmatprep.subr.mxu0 0.0
    %491 = vmatpush1.msra.mxu0 0.0
    %492 = vmatprep.subr.mxu0 0.0
    %493 = vmatpush1.msra.mxu0 0.0
    %494 = vmatprep.subr.mxu0 0.0
    %495 = vmatpush1.msra.mxu0 0.0
    %496 = vmatprep.subr.mxu0 0.0
    %497 = vmatpush1.msra.mxu0 0.0
    %498 = vmatprep.subr.mxu0 0.0
    %499 = vmatpush1.msra.mxu0 0.0
    %500 = vmatprep.mubr.f32.mxu0 0.0
    %501 = vmatmul.mubr.f32.gmra.mrb[0].mxu0 %v52
    %v502 = vpop.f32.mrb[0].mxu0
    %v503 = vadd.f32 %v210, %v502
    %v504 = vpop.f32.mrb[0].mxu0
    %v505 = vadd.f32 %v214, %v504
    %506 = vdwg.mxu0
    %507 = vst [vmem:[#allocation8] sm:$0xff] %v290
    %508 = vst [vmem:[#allocation8 + $0x8] sm:$0xff] %v292
    %509 = vst [vmem:[#allocation8 + $0x10] sm:$0xff] %v361
    %510 = vst [vmem:[#allocation8 + $0x18] sm:$0xff] %v363
    %511 = vst [vmem:[#allocation8 + $0x20] sm:$0xff] %v432
    %512 = vst [vmem:[#allocation8 + $0x28] sm:$0xff] %v434
    %513 = vst [vmem:[#allocation8 + $0x30] sm:$0xff] %v503
    %514 = vst [vmem:[#allocation8 + $0x38] sm:$0xff] %v505
    // Predicated region
    $region26: #{tpu_custom_call.1} parent=1 // pred_check
      _
    $region27: #{tpu_custom_call.1} parent=1 // pred_check_branch
      %516 = sbr.rel (0) target = $region29
    $region28: #{tpu_custom_call.1} parent=1 // pred_region
      %s518 = ssub.s32 1024, 1024
      %519 = vsyncadd [#allocation4], %s518
      %s521 = sshll.u32 [#allocation8], 4
      %s522 = int_to_ptr.vmem [resolvable:$true] %s521
      %524 = dma.vmem_to_hbm [thread:$0]  %s522, 1024, %s3, [#allocation4]
    $region29: #{tpu_custom_call.1} parent=1 // pred_fallthru
      _
    // Predicated region
    $region30: #{tpu_custom_call.1} parent=1 // pred_check
      _
    $region31: #{tpu_custom_call.1} parent=1 // pred_check_branch
      %526 = sbr.rel (0) target = $region33
    $region32: #{tpu_custom_call.1} parent=1 // pred_region
      %527 = dma.done [#allocation4], 1024
    $region33: #{tpu_custom_call.1} parent=1 // pred_fallthru
      _
    %528 = vsyncpa [#allocation3], 1
    %529 = vsyncpa [#allocation6], 1
    %530 = vsyncpa [#allocation4], 1

</llo_original>
